<compile_context>
chip_gen: v6e
topology: v6e:2x2x1
jax: 0.10.0
libtpu: 0.0.40
codegen_flags: <defaults>
</compile_context>

<pallas_src>
import functools

import jax
import jax.numpy as jnp
from jax import lax
from jax.experimental import pallas as pl
from jax.experimental.pallas import tpu as pltpu

_LANES = 128
_SUBLANES = 8


def _round_up(x, m):
    return ((x + m - 1) // m) * m


def _num_core_splits():
    """2 on dual-TensorCore chips (v7x), else 1 (v2..v6e)."""
    try:
        kind = jax.devices()[0].device_kind.lower()
    except Exception:
        return 1
    return 2 if ("v7" in kind or "tpu7" in kind or kind.endswith("7x")) else 1


def _make_l1_kernel(br, n_blocks, steps_per_core, last_rows):
    """Build the streaming-reduction kernel; all tile geometry is static."""

    # Blocks [0, n_full_blocks) are complete; block n_blocks-1 may be ragged.
    n_full_blocks = n_blocks - (1 if last_rows != br else 0)

    def _fold(x_ref, y_ref, n_groups, part_rows):
        """Sum |x - y| over `n_groups` full (8,128) sublane groups plus an
        optional ragged group with `part_rows` valid rows; returns (8,128) f32.
        Everything stays in vregs -- no (br,128) f32 temp is materialized."""

        def group_absdiff(r):
            r = pl.multiple_of(r, _SUBLANES)
            return jnp.abs(
                x_ref[pl.ds(r, _SUBLANES), :] - y_ref[pl.ds(r, _SUBLANES), :]
            ).astype(jnp.float32)

        acc = jnp.zeros((_SUBLANES, _LANES), jnp.float32)
        if n_groups > 0:
            acc = lax.fori_loop(
                0, n_groups,
                lambda g, a: a + group_absdiff(g * _SUBLANES),
                acc,
                unroll=min(8, n_groups),
            )
        if part_rows:
            d = group_absdiff(n_groups * _SUBLANES)
            row_ids = lax.broadcasted_iota(jnp.int32, (_SUBLANES, _LANES), 0)
            acc = acc + jnp.where(row_ids < part_rows, d, 0.0)
        return acc

    def kernel(x_ref, y_ref, acc_ref):
        p = pl.program_id(0)            # core split (v7x) / size-1 elsewhere
        i = pl.program_id(1)            # streaming step within this core
        g = p * steps_per_core + i      # global block index

        @pl.when(i == 0)
        def _():
            acc_ref[...] = jnp.zeros_like(acc_ref)

        @pl.when(g < n_full_blocks)     # complete interior blocks
        def _():
            acc_ref[...] += _fold(x_ref, y_ref, br // _SUBLANES, 0)

        if last_rows != br:             # static: a ragged last block exists
            @pl.when(g == n_blocks - 1)
            def _():
                acc_ref[...] += _fold(
                    x_ref, y_ref, last_rows // _SUBLANES, last_rows % _SUBLANES
                )
        # Overhang steps (g >= n_blocks, only from the v7x core round-up) fall
        # through: their DMA index is clamped and they accumulate nothing.

    return kernel


@functools.partial(jax.jit, static_argnames=("block_rows",))
def loss_cont(imgs, gts, *, block_rows=8192):
    """Pallas TPU implementation of LossCont.forward: mean(|imgs - gts|)."""
    assert imgs.shape == gts.shape, (imgs.shape, gts.shape)
    n_elems = imgs.size
    if n_elems == 0:                    # torch mean over empty -> NaN
        return jnp.array(jnp.nan, dtype=imgs.dtype)

    x = imgs.reshape(-1)
    y = gts.reshape(-1)
    rem = n_elems % _LANES
    if rem:
        # Rare non-lane-aligned size: minimal zero pad (|0 - 0| = 0 exactly).
        # TODO(synk): mask the sub-128 lane tail in-kernel to drop this copy.
        x = jnp.pad(x, (0, _LANES - rem))
        y = jnp.pad(y, (0, _LANES - rem))
    rows = x.size // _LANES
    x = x.reshape(rows, _LANES)         # free reshape of contiguous data
    y = y.reshape(rows, _LANES)

    # ---- static tile geometry --------------------------------------------
    br = max(_SUBLANES,
             min(_round_up(block_rows, _SUBLANES), _round_up(rows, _SUBLANES)))
    n_blocks = pl.cdiv(rows, br)
    last_rows = rows - (n_blocks - 1) * br          # rows in the last block

    splits = _num_core_splits()                     # 2 only on v7x
    steps_per_core = pl.cdiv(n_blocks, splits)
    total_steps = splits * steps_per_core           # may add 1 overhang step

    if total_steps == n_blocks:
        in_map = lambda p, i: (p * steps_per_core + i, 0)
    else:  # clamp the (at most one) overhang step to the last valid block
        in_map = lambda p, i: (jnp.minimum(p * steps_per_core + i, n_blocks - 1), 0)

    kernel = _make_l1_kernel(br, n_blocks, steps_per_core, last_rows)

    partials = pl.pallas_call(
        kernel,
        out_shape=jax.ShapeDtypeStruct((splits * _SUBLANES, _LANES), jnp.float32),
        grid=(splits, steps_per_core),
        in_specs=[
            pl.BlockSpec((br, _LANES), in_map),
            pl.BlockSpec((br, _LANES), in_map),
        ],
        out_specs=pl.BlockSpec((_SUBLANES, _LANES), lambda p, i: (p, 0)),
        compiler_params=pltpu.CompilerParams(
            dimension_semantics=(
                pltpu.CORE_PARALLEL if splits > 1 else pltpu.ARBITRARY,
                pltpu.ARBITRARY,
            ),
            # 2 inputs x 2 buffers x (br x 128) tiles + headroom; above v5e's
            # 16 MiB scoped default, well below physical VMEM on every chip.
            vmem_limit_bytes=32 * 1024 * 1024,
        ),
        cost_estimate=pl.CostEstimate(
            flops=3 * n_elems,
            transcendentals=0,
            bytes_accessed=n_elems * (imgs.dtype.itemsize + gts.dtype.itemsize),
        ),
    )(x, y)

    # Single tiny final reduction + mean in the wrapper.
    mean = jnp.sum(partials) / jnp.float32(n_elems)
    return mean.astype(imgs.dtype)


def _reference(imgs, gts):
    """Plain-JAX reference mirroring nn.L1Loss()(imgs, gts)."""
    return jnp.mean(jnp.abs(imgs - gts))


if __name__ == "__main__":
    key = jax.random.PRNGKey(0)
    k1, k2, k3, k4 = jax.random.split(key, 4)

    # Primary example: (N, C, H, W) = (2, 4, 16, 16), lane-aligned (no copies).
    imgs = jax.random.normal(k1, (2, 4, 16, 16), dtype=jnp.float32)
    gts = jax.random.normal(k2, (2, 4, 16, 16), dtype=jnp.float32)
    out = jax.block_until_ready(loss_cont(imgs, gts))
    ref = _reference(imgs, gts)
    assert jnp.allclose(out, ref, rtol=1e-5, atol=1e-6), (out, ref)

    # Ragged-tail path: rows not a multiple of the block -> in-kernel mask.
    imgs2 = jax.random.normal(k3, (3, 5, 7, 11), dtype=jnp.float32)
    gts2 = jax.random.normal(k4, (3, 5, 7, 11), dtype=jnp.float32)
    out2 = jax.block_until_ready(loss_cont(imgs2, gts2))
    ref2 = _reference(imgs2, gts2)
    assert jnp.allclose(out2, ref2, rtol=1e-5, atol=1e-6), (out2, ref2)

    print("KERNEL_OK")
</pallas_src>

<mosaic_0001>
module attributes {stable_mosaic.version = 11 : i64} {
  func.func @kernel(%arg0: i32, %arg1: i32, %arg2: memref<16x128xf32, #tpu.memory_space<vmem>>, %arg3: memref<16x128xf32, #tpu.memory_space<vmem>>, %arg4: memref<8x128xf32, #tpu.memory_space<vmem>>) attributes {dimension_semantics = [#tpu.dimension_semantics<arbitrary>, #tpu.dimension_semantics<arbitrary>], iteration_bounds = array<i64: 1, 1>, scalar_prefetch = 0 : i64, scratch_operands = 0 : i64, tpu.core_type = #tpu.core_type<tc>, window_params = [{transform_indices = @transform_0, window_bounds = array<i64: 16, 128>}, {transform_indices = @transform_1, window_bounds = array<i64: 16, 128>}, {transform_indices = @transform_2, window_bounds = array<i64: 8, 128>}]} {
    %c1_i32 = arith.constant 1 : i32
    %0 = arith.muli %arg0, %c1_i32 : i32
    %1 = arith.addi %0, %arg1 : i32
    %c0_i32 = arith.constant 0 : i32
    %2 = arith.cmpi eq, %arg1, %c0_i32 : i32
    %3 = arith.extui %2 : i1 to i32
    %c0_i32_0 = arith.constant 0 : i32
    %4 = arith.cmpi ne, %3, %c0_i32_0 : i32
    scf.if %4 {
      %cst = arith.constant 0.000000e+00 : f32
      %8 = vector.broadcast %cst : f32 to vector<8x128xf32>
      %c0 = arith.constant 0 : index
      %c0_3 = arith.constant 0 : index
      %9 = vector.load %arg4[%c0, %c0_3] : memref<8x128xf32, #tpu.memory_space<vmem>>, vector<8x128xf32>
      tpu.vector_store %arg4[%c0, %c0_3], %8 {strides = array<i32>} : memref<8x128xf32, #tpu.memory_space<vmem>>, vector<8x128xf32>,
    } else {
    }
    %c1_i32_1 = arith.constant 1 : i32
    %5 = arith.cmpi slt, %1, %c1_i32_1 : i32
    %6 = arith.extui %5 : i1 to i32
    %c0_i32_2 = arith.constant 0 : i32
    %7 = arith.cmpi ne, %6, %c0_i32_2 : i32
    scf.if %7 {
      %c0 = arith.constant 0 : index
      %c0_3 = arith.constant 0 : index
      %8 = vector.load %arg4[%c0, %c0_3] : memref<8x128xf32, #tpu.memory_space<vmem>>, vector<8x128xf32>
      %cst = arith.constant 0.000000e+00 : f32
      %9 = vector.broadcast %cst : f32 to vector<8x128xf32>
      %c0_i32_4 = arith.constant 0 : i32
      %c8_i32 = arith.constant 8 : i32
      %10 = arith.muli %c0_i32_4, %c8_i32 : i32
      %11 = tpu.assume_multiple %10, 8 : i32
      %12 = arith.index_cast %11 : i32 to index
      %c0_5 = arith.constant 0 : index
      %13 = vector.load %arg2[%12, %c0_5] : memref<16x128xf32, #tpu.memory_space<vmem>>, vector<8x128xf32>
      %14 = arith.index_cast %11 : i32 to index
      %c0_6 = arith.constant 0 : index
      %15 = vector.load %arg3[%14, %c0_6] : memref<16x128xf32, #tpu.memory_space<vmem>>, vector<8x128xf32>
      %16 = arith.subf %13, %15 : vector<8x128xf32>
      %17 = math.absf %16 : vector<8x128xf32>
      %18 = arith.addf %9, %17 : vector<8x128xf32>
      %c1_i32_7 = arith.constant 1 : i32
      %c8_i32_8 = arith.constant 8 : i32
      %19 = arith.muli %c1_i32_7, %c8_i32_8 : i32
      %20 = tpu.assume_multiple %19, 8 : i32
      %21 = arith.index_cast %20 : i32 to index
      %c0_9 = arith.constant 0 : index
      %22 = vector.load %arg2[%21, %c0_9] : memref<16x128xf32, #tpu.memory_space<vmem>>, vector<8x128xf32>
      %23 = arith.index_cast %20 : i32 to index
      %c0_10 = arith.constant 0 : index
      %24 = vector.load %arg3[%23, %c0_10] : memref<16x128xf32, #tpu.memory_space<vmem>>, vector<8x128xf32>
      %25 = arith.subf %22, %24 : vector<8x128xf32>
      %26 = math.absf %25 : vector<8x128xf32>
      %27 = arith.addf %18, %26 : vector<8x128xf32>
      %c2_i32 = arith.constant 2 : i32
      %28 = arith.addf %8, %27 : vector<8x128xf32>
      %c0_11 = arith.constant 0 : index
      %c0_12 = arith.constant 0 : index
      %29 = vector.load %arg4[%c0_11, %c0_12] : memref<8x128xf32, #tpu.memory_space<vmem>>, vector<8x128xf32>
      tpu.vector_store %arg4[%c0_11, %c0_12], %28 {strides = array<i32>} : memref<8x128xf32, #tpu.memory_space<vmem>>, vector<8x128xf32>,
    } else {
    }
    return
  }
  func.func @transform_0(%arg0: i32, %arg1: i32) -> (i32, i32) {
    %c1_i32 = arith.constant 1 : i32
    %0 = arith.muli %arg0, %c1_i32 : i32
    %1 = arith.addi %0, %arg1 : i32
    %c0_i32 = arith.constant 0 : i32
    %c0_i32_0 = arith.constant 0 : i32
    return %1, %c0_i32 : i32, i32
  }
  func.func @transform_1(%arg0: i32, %arg1: i32) -> (i32, i32) {
    %c1_i32 = arith.constant 1 : i32
    %0 = arith.muli %arg0, %c1_i32 : i32
    %1 = arith.addi %0, %arg1 : i32
    %c0_i32 = arith.constant 0 : i32
    %c0_i32_0 = arith.constant 0 : i32
    return %1, %c0_i32 : i32, i32
  }
  func.func @transform_2(%arg0: i32, %arg1: i32) -> (i32, i32) {
    %c0_i32 = arith.constant 0 : i32
    %c0_i32_0 = arith.constant 0 : i32
    return %arg0, %c0_i32 : i32, i32
  }
}

</mosaic_0001>

<llo_original>
// kernel: loss_cont.1
$region0: #{loss_cont.1}
  #allocation0 [shape = 'u32[]', space=smem, size = 0x4, offset = 0x4, fixed_abs, tag = 'smem constant byte address 0x4 - core index']
  #allocation1 [shape = 'u32[144,128]{1,0:T(1,128)}', space=vmem, size = 0x12000, scoped, tag = 'internal scratch']
  %s0 = inlined_call_operand.vmem [shape: f32[16,128], index: 0, kind: input, shape index: {}]
  %s1 = inlined_call_operand.vmem [shape: f32[16,128], index: 1, kind: input, shape index: {}]
  %s2 = inlined_call_operand.vmem [shape: f32[8,128], index: 2, kind: output, shape index: {}]
  %s3 = sld [smem:[#allocation0]]
  $region26: #{loss_cont.1} parent=0
    _
  %s5 = ssub.s32 1, %s3
  %s6 = scalar_select 0, %s5, %s3
  // Predicated region
  $region2: #{loss_cont.1} parent=0 // pred_check
    _
  $region3: #{loss_cont.1} parent=0 // pred_check_branch
    %8 = sbr.rel (0) target = $region5
  $region4: #{loss_cont.1} parent=0 // pred_region
    %s9 = sadd.s32 0, 0
    %s10 = smul.u32 2, %s9
    %p11 = scmp.lt.s32.totalorder %s10, 1
    %s12 = scalar_select %p11, %s10, 1
    %s13 = smul.addr %s12, 8
    %s14 = scalar_lea.vmem %s0, %s13
    %s15 = sadd.s32 0, 0
    %s16 = smul.u32 2, %s15
  $region5: #{loss_cont.1} parent=0 // pred_fallthru
    _
  // Predicated region
  $region6: #{loss_cont.1} parent=0 // pred_check
    _
  $region7: #{loss_cont.1} parent=0 // pred_check_branch
    %18 = sbr.rel (0) target = $region9
  $region8: #{loss_cont.1} parent=0 // pred_region
    %s19 = sadd.s32 0, 0
    %s20 = smul.u32 2, %s19
    %p21 = scmp.lt.s32.totalorder %s20, 1
    %s22 = scalar_select %p21, %s20, 1
    %s23 = smul.addr %s22, 8
    %s24 = scalar_lea.vmem %s1, %s23
    %s25 = sadd.s32 0, 0
    %s26 = smul.u32 2, %s25
  $region9: #{loss_cont.1} parent=0 // pred_fallthru
    _
  %s27 = sadd.s32 0, 0
  %s28 = smul.u32 2, %s27
  %p29 = scmp.lt.s32.totalorder %s28, 1
  %s30 = scalar_select %p29, %s28, 1
  %s31 = smul.addr %s30, 8
  %s32 = scalar_lea.vmem %s0, %s31
  %s33 = sadd.s32 0, 0
  %s34 = smul.u32 2, %s33
  %p35 = scmp.lt.s32.totalorder %s34, 1
  %s36 = scalar_select %p35, %s34, 1
  %s37 = smul.addr %s36, 8
  %s38 = scalar_lea.vmem %s1, %s37
  %s39 = sadd.s32 0, 0
  %s40 = smul.u32 2, %s39
  %p41 = scmp.lt.s32.totalorder %s40, 1
  %s42 = scalar_select %p41, %s40, 1
  %s43 = smul.addr %s42, 8
  %s44 = scalar_lea.vmem %s0, %s43
  %s45 = sadd.s32 0, 0
  %s46 = smul.u32 2, %s45
  %s47 = sadd.s32 0, 0
  %s48 = smul.u32 2, %s47
  %p49 = scmp.lt.s32.totalorder %s48, 1
  %s50 = scalar_select %p49, %s48, 1
  %s51 = smul.addr %s50, 8
  %s52 = scalar_lea.vmem %s1, %s51
  %s53 = sadd.s32 0, 0
  %s54 = smul.u32 2, %s53
  %s55 = sadd.s32 0, 0
  %p56 = scmp.eq.s32.totalorder 0, 0
  // Predicated region
  $region10: #{loss_cont.1} parent=0 // pred_check
    %p57 = pneg %p56
  $region11: #{loss_cont.1} parent=0 // pred_check_branch
    %59 = sbr.rel (%p57) target = $region13
  $region12: #{loss_cont.1} parent=0 // pred_region
    %60 = vst [vmem:[%s2] sm:$0xff] 0.0
  $region13: #{loss_cont.1} parent=0 // pred_fallthru
    _
  %p61 = scmp.lt.s32.totalorder %s55, 1
  // Predicated region
  $region14: #{loss_cont.1} parent=0 // pred_check
    %p62 = pneg %p61
  $region15: #{loss_cont.1} parent=0 // pred_check_branch
    %64 = sbr.rel (%p62) target = $region17
  $region16: #{loss_cont.1} parent=0 // pred_region
    %v65 = vld [vmem:[%s2] sm:$0xff]
    %v66 = vld [vmem:[%s44] sm:$0xff]
    %v67 = vld [vmem:[%s52] sm:$0xff]
    %v68 = vsub.f32 %v66, %v67
    %v69 = vand.u32 2147483647, %v68
    %v70 = vadd.f32 %v69, 0.0
    %s71 = scalar_lea.vmem %s44, 8
    %v72 = vld [vmem:[%s71] sm:$0xff]
    %s73 = scalar_lea.vmem %s52, 8
    %v74 = vld [vmem:[%s73] sm:$0xff]
    %v75 = vsub.f32 %v72, %v74
    %v76 = vand.u32 2147483647, %v75
    %v77 = vadd.f32 %v70, %v76
    %v78 = vadd.f32 %v65, %v77
    %79 = vst [vmem:[%s2] sm:$0xff] %v78
  $region17: #{loss_cont.1} parent=0 // pred_fallthru
    _
  // Predicated region
  $region18: #{loss_cont.1} parent=0 // pred_check
    _
  $region19: #{loss_cont.1} parent=0 // pred_check_branch
    %81 = sbr.rel (0) target = $region21
  $region20: #{loss_cont.1} parent=0 // pred_region
    _
  $region21: #{loss_cont.1} parent=0 // pred_fallthru
    _
  // Predicated region
  $region22: #{loss_cont.1} parent=0 // pred_check
    _
  $region23: #{loss_cont.1} parent=0 // pred_check_branch
    %83 = sbr.rel (0) target = $region25
  $region24: #{loss_cont.1} parent=0 // pred_region
    _
  $region25: #{loss_cont.1} parent=0 // pred_fallthru
    _

</llo_original>
